<compile_context>
chip_gen: v5e
topology: v5e:2x2
jax: 0.10.0
libtpu: 0.0.40
codegen_flags: <defaults>
</compile_context>

<pallas_src>
import jax
import jax.numpy as jnp
from jax import lax
from jax.experimental import pallas as pl
from jax.experimental.pallas import tpu as pltpu


def _cdiv(a: int, b: int) -> int:
    return (a + b - 1) // b


def _round_up(x: int, m: int) -> int:
    return _cdiv(x, m) * m


_LANE_CANDIDATES = (2048, 1024, 512, 256, 128)
_MAX_BLOCK_ELEMS = 512 * 1024  # 2 MiB per input block at f32


def _make_fro_kernel(tm, tn, row_grp, vm, vn, row_mask, col_mask):
    """Kernel: sum of squared differences of a (tm, tn) block, folded down to
    an (8, 128) lane-dense partial-sum slab."""
    assert tm % row_grp == 0 and tn % 128 == 0 and row_grp % 8 == 0

    def kernel(a_ref, g_ref, o_ref):
        acc = jnp.zeros((8, tn), jnp.float32)

        # Hoist iotas / invariant masks out of the unrolled loop (JAX does not
        # CSE broadcast_in_dim).  Only built when the edge is actually ragged.
        if row_mask:
            row0 = pl.program_id(0) * tm
            row_iota = lax.broadcasted_iota(jnp.int32, (row_grp, tn), 0)
        if col_mask:
            col0 = pl.program_id(1) * tn
            col_iota = lax.broadcasted_iota(jnp.int32, (row_grp, tn), 1)
            col_valid = (col0 + col_iota) < vn  # invariant across row groups

        for k in range(tm // row_grp):
            # Static, tile-aligned slices of the refs (layout preserving).
            a = a_ref[k * row_grp:(k + 1) * row_grp, :].astype(jnp.float32)
            g = g_ref[k * row_grp:(k + 1) * row_grp, :].astype(jnp.float32)
            d = a - g
            sq = d * d
            if row_mask or col_mask:
                valid = None
                if row_mask:
                    valid = (row0 + k * row_grp + row_iota) < vm
                if col_mask:
                    valid = col_valid if valid is None else (valid & col_valid)
                sq = jnp.where(valid, sq, 0.0)
            # Sublane-group fold to (8, tn): pure vreg-wise VPU adds.
            for r in range(row_grp // 8):
                acc = acc + sq[r * 8:(r + 1) * 8, :]

        # Lane-group fold to (8, 128): still vreg-to-vreg adds (no XLU).
        out = acc[:, 0:128]
        for j in range(1, tn // 128):
            out = out + acc[:, j * 128:(j + 1) * 128]
        o_ref[...] = out

    return kernel


def stgsn_loss(adj_est: jax.Array, gnd: jax.Array) -> jax.Array:
    """loss = ||adj_est - gnd||_F ** 2, computed with a Pallas TPU kernel."""
    assert adj_est.shape == gnd.shape, "adj_est and gnd must have the same shape"

    shape = adj_est.shape
    total = 1
    for s in shape:
        total *= int(s)
    if total == 0:
        return jnp.zeros((), jnp.float32)

    # ---- Zero-copy lane-dense 2-D view ----------------------------------
    vm = vn = None
    for lanes in _LANE_CANDIDATES:
        if total % lanes == 0:
            vm, vn = total // lanes, lanes  # contiguous flatten (free reshape)
            break
    if vm is None:
        # Fall back to the natural 2-D view; ragged edges handled in-kernel.
        if len(shape) >= 2:
            vn = int(shape[-1])
            vm = total // vn
        else:
            vm, vn = 1, total
    a2 = adj_est.reshape(vm, vn)
    g2 = gnd.reshape(vm, vn)

    # Minimum sublane group for the narrowest input dtype.
    itemsize = min(jnp.dtype(adj_est.dtype).itemsize, jnp.dtype(gnd.dtype).itemsize)
    row_grp = {4: 8, 2: 16, 1: 32}.get(itemsize, 8)

    # ---- Tile selection ---------------------------------------------------
    tn = min(2048, _round_up(vn, 128))
    tm_cap = max(row_grp, (_MAX_BLOCK_ELEMS // tn) // row_grp * row_grp)
    tm = min(tm_cap, _round_up(vm, row_grp))

    grid_m = _cdiv(vm, tm)
    grid_n = _cdiv(vn, tn)

    # Make sure there are >= 2 blocks along a 'parallel' axis (v7x has 2 TCs;
    # splitting is free for a memory-bound kernel, neutral on v5e/v6e).
    if grid_m * grid_n == 1:
        if tm >= 2 * row_grp:
            tm = _round_up(_cdiv(vm, 2), row_grp)
            grid_m = _cdiv(vm, tm)
        elif tn >= 256:
            tn //= 2
            grid_n = _cdiv(vn, tn)

    row_mask = (vm % tm) != 0
    col_mask = (vn % tn) != 0

    kernel = _make_fro_kernel(tm, tn, row_grp, vm, vn, row_mask, col_mask)

    in_bytes = (jnp.dtype(adj_est.dtype).itemsize + jnp.dtype(gnd.dtype).itemsize)
    out_bytes = grid_m * grid_n * 8 * 128 * 4

    partials = pl.pallas_call(
        kernel,
        out_shape=jax.ShapeDtypeStruct((grid_m * 8, grid_n * 128), jnp.float32),
        grid=(grid_m, grid_n),
        in_specs=[
            pl.BlockSpec((tm, tn), lambda i, j: (i, j)),
            pl.BlockSpec((tm, tn), lambda i, j: (i, j)),
        ],
        # Each grid step owns its own (8, 128) output block -> no accumulator,
        # no init phase, both grid axes safely 'parallel'.
        out_specs=pl.BlockSpec((8, 128), lambda i, j: (i, j)),
        compiler_params=pltpu.CompilerParams(
            dimension_semantics=("parallel", "parallel"),
            vmem_limit_bytes=32 * 1024 * 1024,
        ),
        cost_estimate=pl.CostEstimate(
            flops=3 * total,
            transcendentals=0,
            bytes_accessed=total * in_bytes + out_bytes,
        ),
    )(a2, g2)

    # Tiny final reduction of the lane-dense partial sums in plain JAX.
    return jnp.sum(partials)


if __name__ == "__main__":
    key = jax.random.PRNGKey(0)
    k1, k2, k3, k4, k5, k6 = jax.random.split(key, 6)

    # 1) Typical STGSN case: small weighted adjacency matrices (aligned shape,
    #    flattened dense-lane path, no masking).
    N = 256
    adj_est = jax.random.uniform(k1, (N, N), dtype=jnp.float32)
    gnd = jax.random.uniform(k2, (N, N), dtype=jnp.float32)
    loss = jax.block_until_ready(stgsn_loss(adj_est, gnd))
    ref = jnp.sum((adj_est - gnd) ** 2)
    assert jnp.allclose(loss, ref, rtol=1e-5, atol=1e-5), (loss, ref)

    # 2) Unaligned adjacency size: exercises the cdiv grid + ragged-edge
    #    masking path (no jnp.pad copies anywhere).
    M2 = 100
    a2 = jax.random.uniform(k3, (M2, M2), dtype=jnp.float32)
    g2 = jax.random.uniform(k4, (M2, M2), dtype=jnp.float32)
    loss2 = jax.block_until_ready(stgsn_loss(a2, g2))
    ref2 = jnp.sum((a2 - g2) ** 2)
    assert jnp.allclose(loss2, ref2, rtol=1e-5, atol=1e-5), (loss2, ref2)

    # 3) bf16, 3-D input: exercises the sub-32-bit (16-row sublane group) path.
    a3 = jax.random.uniform(k5, (3, 50, 64), dtype=jnp.float32).astype(jnp.bfloat16)
    g3 = jax.random.uniform(k6, (3, 50, 64), dtype=jnp.float32).astype(jnp.bfloat16)
    loss3 = jax.block_until_ready(stgsn_loss(a3, g3))
    ref3 = jnp.sum((a3.astype(jnp.float32) - g3.astype(jnp.float32)) ** 2)
    assert jnp.allclose(loss3, ref3, rtol=1e-4, atol=1e-4), (loss3, ref3)

    print("KERNEL_OK")
</pallas_src>

<mosaic_0001>
module attributes {stable_mosaic.version = 11 : i64} {
  func.func @kernel(%arg0: i32, %arg1: i32, %arg2: memref<16x2048xf32, #tpu.memory_space<vmem>>, %arg3: memref<16x2048xf32, #tpu.memory_space<vmem>>, %arg4: memref<8x128xf32, #tpu.memory_space<vmem>>) attributes {dimension_semantics = [#tpu.dimension_semantics<parallel>, #tpu.dimension_semantics<parallel>], iteration_bounds = array<i64: 2, 1>, scalar_prefetch = 0 : i64, scratch_operands = 0 : i64, tpu.core_type = #tpu.core_type<tc>, window_params = [{transform_indices = @transform_0, window_bounds = array<i64: 16, 2048>}, {transform_indices = @transform_1, window_bounds = array<i64: 16, 2048>}, {transform_indices = @transform_2, window_bounds = array<i64: 8, 128>}]} {
    %cst = arith.constant 0.000000e+00 : f32
    %0 = vector.broadcast %cst : f32 to vector<8x2048xf32>
    %c0 = arith.constant 0 : index
    %c0_0 = arith.constant 0 : index
    %1 = vector.load %arg2[%c0, %c0_0] : memref<16x2048xf32, #tpu.memory_space<vmem>>, vector<8x2048xf32>
    %c0_1 = arith.constant 0 : index
    %c0_2 = arith.constant 0 : index
    %2 = vector.load %arg3[%c0_1, %c0_2] : memref<16x2048xf32, #tpu.memory_space<vmem>>, vector<8x2048xf32>
    %3 = arith.subf %1, %2 : vector<8x2048xf32>
    %4 = arith.mulf %3, %3 : vector<8x2048xf32>
    %5 = arith.addf %0, %4 : vector<8x2048xf32>
    %c8 = arith.constant 8 : index
    %c0_3 = arith.constant 0 : index
    %6 = vector.load %arg2[%c8, %c0_3] : memref<16x2048xf32, #tpu.memory_space<vmem>>, vector<8x2048xf32>
    %c8_4 = arith.constant 8 : index
    %c0_5 = arith.constant 0 : index
    %7 = vector.load %arg3[%c8_4, %c0_5] : memref<16x2048xf32, #tpu.memory_space<vmem>>, vector<8x2048xf32>
    %8 = arith.subf %6, %7 : vector<8x2048xf32>
    %9 = arith.mulf %8, %8 : vector<8x2048xf32>
    %10 = arith.addf %5, %9 : vector<8x2048xf32>
    %11 = vector.extract_strided_slice %10 {offsets = [0, 0], sizes = [8, 128], strides = [1, 1]} : vector<8x2048xf32> to vector<8x128xf32>
    %12 = vector.extract_strided_slice %10 {offsets = [0, 128], sizes = [8, 128], strides = [1, 1]} : vector<8x2048xf32> to vector<8x128xf32>
    %13 = arith.addf %11, %12 : vector<8x128xf32>
    %14 = vector.extract_strided_slice %10 {offsets = [0, 256], sizes = [8, 128], strides = [1, 1]} : vector<8x2048xf32> to vector<8x128xf32>
    %15 = arith.addf %13, %14 : vector<8x128xf32>
    %16 = vector.extract_strided_slice %10 {offsets = [0, 384], sizes = [8, 128], strides = [1, 1]} : vector<8x2048xf32> to vector<8x128xf32>
    %17 = arith.addf %15, %16 : vector<8x128xf32>
    %18 = vector.extract_strided_slice %10 {offsets = [0, 512], sizes = [8, 128], strides = [1, 1]} : vector<8x2048xf32> to vector<8x128xf32>
    %19 = arith.addf %17, %18 : vector<8x128xf32>
    %20 = vector.extract_strided_slice %10 {offsets = [0, 640], sizes = [8, 128], strides = [1, 1]} : vector<8x2048xf32> to vector<8x128xf32>
    %21 = arith.addf %19, %20 : vector<8x128xf32>
    %22 = vector.extract_strided_slice %10 {offsets = [0, 768], sizes = [8, 128], strides = [1, 1]} : vector<8x2048xf32> to vector<8x128xf32>
    %23 = arith.addf %21, %22 : vector<8x128xf32>
    %24 = vector.extract_strided_slice %10 {offsets = [0, 896], sizes = [8, 128], strides = [1, 1]} : vector<8x2048xf32> to vector<8x128xf32>
    %25 = arith.addf %23, %24 : vector<8x128xf32>
    %26 = vector.extract_strided_slice %10 {offsets = [0, 1024], sizes = [8, 128], strides = [1, 1]} : vector<8x2048xf32> to vector<8x128xf32>
    %27 = arith.addf %25, %26 : vector<8x128xf32>
    %28 = vector.extract_strided_slice %10 {offsets = [0, 1152], sizes = [8, 128], strides = [1, 1]} : vector<8x2048xf32> to vector<8x128xf32>
    %29 = arith.addf %27, %28 : vector<8x128xf32>
    %30 = vector.extract_strided_slice %10 {offsets = [0, 1280], sizes = [8, 128], strides = [1, 1]} : vector<8x2048xf32> to vector<8x128xf32>
    %31 = arith.addf %29, %30 : vector<8x128xf32>
    %32 = vector.extract_strided_slice %10 {offsets = [0, 1408], sizes = [8, 128], strides = [1, 1]} : vector<8x2048xf32> to vector<8x128xf32>
    %33 = arith.addf %31, %32 : vector<8x128xf32>
    %34 = vector.extract_strided_slice %10 {offsets = [0, 1536], sizes = [8, 128], strides = [1, 1]} : vector<8x2048xf32> to vector<8x128xf32>
    %35 = arith.addf %33, %34 : vector<8x128xf32>
    %36 = vector.extract_strided_slice %10 {offsets = [0, 1664], sizes = [8, 128], strides = [1, 1]} : vector<8x2048xf32> to vector<8x128xf32>
    %37 = arith.addf %35, %36 : vector<8x128xf32>
    %38 = vector.extract_strided_slice %10 {offsets = [0, 1792], sizes = [8, 128], strides = [1, 1]} : vector<8x2048xf32> to vector<8x128xf32>
    %39 = arith.addf %37, %38 : vector<8x128xf32>
    %40 = vector.extract_strided_slice %10 {offsets = [0, 1920], sizes = [8, 128], strides = [1, 1]} : vector<8x2048xf32> to vector<8x128xf32>
    %41 = arith.addf %39, %40 : vector<8x128xf32>
    %c0_6 = arith.constant 0 : index
    %c0_7 = arith.constant 0 : index
    %42 = vector.load %arg4[%c0_6, %c0_7] : memref<8x128xf32, #tpu.memory_space<vmem>>, vector<8x128xf32>
    tpu.vector_store %arg4[%c0_6, %c0_7], %41 {strides = array<i32>} : memref<8x128xf32, #tpu.memory_space<vmem>>, vector<8x128xf32>,
    return
  }
  func.func @transform_0(%arg0: i32, %arg1: i32) -> (i32, i32) {
    %c0_i32 = arith.constant 0 : i32
    return %arg0, %arg1 : i32, i32
  }
  func.func @transform_1(%arg0: i32, %arg1: i32) -> (i32, i32) {
    %c0_i32 = arith.constant 0 : i32
    return %arg0, %arg1 : i32, i32
  }
  func.func @transform_2(%arg0: i32, %arg1: i32) -> (i32, i32) {
    %c0_i32 = arith.constant 0 : i32
    return %arg0, %arg1 : i32, i32
  }
}

</mosaic_0001>

<llo_original>
// kernel: tpu_custom_call.1
$region0: #{tpu_custom_call.1}
  #allocation0 [shape = 'u32[]', space=smem, size = 0x4, offset = 0x4, fixed_abs, tag = 'smem constant byte address 0x4 - core index']
  #allocation1 [shape = 'u32[72,128]{1,0:T(1,128)}', space=vmem, size = 0x9000, scoped, tag = 'internal scratch']
  %s0 = inlined_call_operand.hbm [shape: f32[32,2048], index: 0, kind: input, shape index: {}]
  %s1 = inlined_call_operand.hbm [shape: f32[32,2048], index: 1, kind: input, shape index: {}]
  %s2 = inlined_call_operand.hbm [shape: f32[16,128], index: 2, kind: output, shape index: {}]
  %s3 = sld [smem:[#allocation0]]
  $region49: #{tpu_custom_call.1} parent=0
    _
  %s5 = ssub.s32 1, %s3
  %s6 = scalar_select 0, %s5, %s3
  $region1: #{tpu_custom_call.1} parent=0
    #allocation2 [shape = 'u8[262144]{0}', space=vmem, size = 0x40000, scoped, tag = 'input window, operand 0']
    #allocation3 [shape = 's32[2]{0}', space=sflag, size = 0x8, scoped, tag = 'scoped memory for tpu_custom_call.1']
    #allocation4 [shape = 's32[2]{0}', space=sflag, size = 0x8, scoped, tag = 'scoped memory for tpu_custom_call.1']
    #allocation5 [shape = 'u8[262144]{0}', space=vmem, size = 0x40000, scoped, tag = 'input window, operand 1']
    #allocation6 [shape = 's32[2]{0}', space=sflag, size = 0x8, scoped, tag = 'scoped memory for tpu_custom_call.1']
    #allocation7 [shape = 'u8[8192]{0}', space=vmem, size = 0x2000, scoped, tag = 'output window, operand 0']
    %7 = vsyncpa [#allocation3], 0
    %s8 = scalar_lea.sflag [#allocation3], 1
    %9 = vsyncpa %s8, 0
    %10 = vsyncpa [#allocation6], 0
    %s11 = scalar_lea.sflag [#allocation6], 1
    %12 = vsyncpa %s11, 0
    %13 = vsyncpa [#allocation4], 0
    %s14 = scalar_lea.sflag [#allocation4], 1
    %15 = vsyncpa %s14, 0
    loop: start=0, step=1, limit=4
    $region2: #{tpu_custom_call.1} parent=1 // loop_pre_header
      _
    $region3: #{tpu_custom_call.1} parent=1 // loop_header
      %s17 = sphi 0, %s21
      %p18 = scmp.ge.s32.totalorder %s17, 4
      %s24 = sphi 0, %s36
      %s25 = sphi 0, %s32
      %s26 = sphi 0, %s24
      %s27 = sphi 0, %s25
      %s28 = sphi 0, %s26
      %s29 = sphi 0, %s27
      %s41 = sphi 0, %s43
      %s44 = sphi 0, %s41
      %s45 = sphi 0, %s44
      %s61 = sphi 0, %s45
      %s69 = sphi 0, %s71
      %s72 = sphi 0, %s69
      %s73 = sphi 0, %s72
      %s89 = sphi 0, %s73
      %s97 = sphi 0, %s99
      %s100 = sphi 0, %s97
      %s101 = sphi 0, %s100
      %s117 = sphi 0, %s101
    $region4: #{tpu_custom_call.1} parent=1 // loop_header_branch
      %20 = sbr.rel (%p18) target = $region8
    $region5: #{tpu_custom_call.1} parent=1 // loop_body
      %s22 = ssub.s32 %s17, 1
      %s23 = ssub.s32 %s17, 2
      %s30 = sadd.s32 1, %s25
      %p31 = scmp.ge.s32.totalorder %s30, 1
      %s32 = scalar_select %p31, 0, %s30
      %s33 = sadd.s32 1, %s24
      %s34 = scalar_select %p31, %s33, %s24
      %p35 = scmp.ge.s32.totalorder %s34, 2
      %s36 = scalar_select %p35, 0, %s34
      %s37 = ssub.s32 %s24, %s36
      %s38 = ssub.s32 %s25, %s32
      %s39 = sor.u32 %s37, %s38
      %p40 = scmp.eq.s32.totalorder %s39, 0
      %s42 = sadd.s32 %s41, 1
      %s43 = scalar_select %p40, %s41, %s42
      %p46 = pneg %p40
      %p47 = scmp.eq.s32.totalorder %s17, 1
      %p48 = por %p46, %p47
      %p49 = scmp.ne.s32.totalorder %s41, %s44
      %p50 = scmp.eq.s32.totalorder %s17, 0
      %p51 = por %p49, %p50
      %p52 = scmp.ne.s32.totalorder %s41, %s44
      %p53 = scmp.eq.s32.totalorder %s22, 1
      %p54 = por %p52, %p53
      %p55 = scmp.ne.s32.totalorder %s44, %s45
      %p56 = scmp.eq.s32.totalorder %s22, 0
      %p57 = por %p55, %p56
      %p58 = scmp.ne.s32.totalorder %s44, %s45
      %p59 = scmp.eq.s32.totalorder %s23, 1
      %p60 = por %p58, %p59
      %p62 = scmp.ne.s32.totalorder %s45, %s61
      %p63 = scmp.eq.s32.totalorder %s23, 0
      %p64 = por %p62, %p63
      %s65 = ssub.s32 %s24, %s36
      %s66 = ssub.s32 %s25, %s32
      %s67 = sor.u32 %s65, %s66
      %p68 = scmp.eq.s32.totalorder %s67, 0
      %s70 = sadd.s32 %s69, 1
      %s71 = scalar_select %p68, %s69, %s70
      %p74 = pneg %p68
      %p75 = scmp.eq.s32.totalorder %s17, 1
      %p76 = por %p74, %p75
      %p77 = scmp.ne.s32.totalorder %s69, %s72
      %p78 = scmp.eq.s32.totalorder %s17, 0
      %p79 = por %p77, %p78
      %p80 = scmp.ne.s32.totalorder %s69, %s72
      %p81 = scmp.eq.s32.totalorder %s22, 1
      %p82 = por %p80, %p81
      %p83 = scmp.ne.s32.totalorder %s72, %s73
      %p84 = scmp.eq.s32.totalorder %s22, 0
      %p85 = por %p83, %p84
      %p86 = scmp.ne.s32.totalorder %s72, %s73
      %p87 = scmp.eq.s32.totalorder %s23, 1
      %p88 = por %p86, %p87
      %p90 = scmp.ne.s32.totalorder %s73, %s89
      %p91 = scmp.eq.s32.totalorder %s23, 0
      %p92 = por %p90, %p91
      %s93 = ssub.s32 %s24, %s36
      %s94 = ssub.s32 %s25, %s32
      %s95 = sor.u32 %s93, %s94
      %p96 = scmp.eq.s32.totalorder %s95, 0
      %s98 = sadd.s32 %s97, 1
      %s99 = scalar_select %p96, %s97, %s98
      %p102 = pneg %p96
      %p103 = scmp.eq.s32.totalorder %s17, 1
      %p104 = por %p102, %p103
      %p105 = scmp.ne.s32.totalorder %s97, %s100
      %p106 = scmp.eq.s32.totalorder %s17, 0
      %p107 = por %p105, %p106
      %p108 = scmp.ne.s32.totalorder %s97, %s100
      %p109 = scmp.eq.s32.totalorder %s22, 1
      %p110 = por %p108, %p109
      %p111 = scmp.ne.s32.totalorder %s100, %s101
      %p112 = scmp.eq.s32.totalorder %s22, 0
      %p113 = por %p111, %p112
      %p114 = scmp.ne.s32.totalorder %s100, %s101
      %p115 = scmp.eq.s32.totalorder %s23, 1
      %p116 = por %p114, %p115
      %p118 = scmp.ne.s32.totalorder %s101, %s117
      %p119 = scmp.eq.s32.totalorder %s23, 0
      %p120 = por %p118, %p119
      %p121 = scmp.le.s32.totalorder 1, %s17
      %p122 = scmp.lt.s32.totalorder %s17, 3
      %p123 = pnand %p121, %p122
      %p124 = pneg %p123
      // Predicated region
      $region9: #{tpu_custom_call.1} parent=5 // pred_check
        _
      $region10: #{tpu_custom_call.1} parent=5 // pred_check_branch
        %126 = sbr.rel (%p123) target = $region12
      $region11: #{tpu_custom_call.1} parent=5 // pred_region
        %s127 = ssub.s32 %s17, 1
      $region12: #{tpu_custom_call.1} parent=5 // pred_fallthru
        _
      %p128 = scmp.lt.s32.totalorder %s17, 2
      // Predicated region
      $region13: #{tpu_custom_call.1} parent=5 // pred_check
        %p129 = pneg %p128
      $region14: #{tpu_custom_call.1} parent=5 // pred_check_branch
        %131 = sbr.rel (%p129) target = $region16
      $region15: #{tpu_custom_call.1} parent=5 // pred_region
        // Predicated region
        $region17: #{tpu_custom_call.1} parent=15 // pred_check
          %p132 = pneg %p51
        $region18: #{tpu_custom_call.1} parent=15 // pred_check_branch
          %134 = sbr.rel (%p132) target = $region20
        $region19: #{tpu_custom_call.1} parent=15 // pred_region
          %s135 = sand.u32 %s41, 1
          %s136 = scalar_lea.sflag [#allocation3], %s135
          %s137 = sand.u32 %s41, 1
          %s138 = smul.addr %s137, 256
          %s139 = scalar_lea.vmem [#allocation2], %s138
          %s140 = smul.u32 2, %s24
          %s141 = smul.u32 16, %s25
          %143 = vsyncadd %s136, 0
          %s144 = smul.addr %s140, 16
          %s145 = sadd.s32 %s141, %s144
          %s146 = smul.addr %s145, 8
          %s147 = scalar_lea.hbm %s0, %s146
          %s148 = sshll.u32 %s147, 4
          %s149 = int_to_ptr.hbm [resolvable:$true] %s148
          %s150 = sshll.u32 %s139, 4
          %s151 = int_to_ptr.vmem [resolvable:$true] %s150
          %156 = dma.hbm_to_vmem [thread:$0]  %s149, 4096, %s151, %s136, 2048, 2048, 128
        $region20: #{tpu_custom_call.1} parent=15 // pred_fallthru
          _
        // Predicated region
        $region21: #{tpu_custom_call.1} parent=15 // pred_check
          %p157 = pneg %p79
        $region22: #{tpu_custom_call.1} parent=15 // pred_check_branch
          %159 = sbr.rel (%p157) target = $region24
        $region23: #{tpu_custom_call.1} parent=15 // pred_region
          %s160 = sand.u32 %s69, 1
          %s161 = scalar_lea.sflag [#allocation6], %s160
          %s162 = sand.u32 %s69, 1
          %s163 = smul.addr %s162, 256
          %s164 = scalar_lea.vmem [#allocation5], %s163
          %s165 = smul.u32 2, %s24
          %s166 = smul.u32 16, %s25
          %168 = vsyncadd %s161, 0
          %s169 = smul.addr %s165, 16
          %s170 = sadd.s32 %s166, %s169
          %s171 = smul.addr %s170, 8
          %s172 = scalar_lea.hbm %s1, %s171
          %s173 = sshll.u32 %s172, 4
          %s174 = int_to_ptr.hbm [resolvable:$true] %s173
          %s175 = sshll.u32 %s164, 4
          %s176 = int_to_ptr.vmem [resolvable:$true] %s175
          %181 = dma.hbm_to_vmem [thread:$0]  %s174, 4096, %s176, %s161, 2048, 2048, 128
        $region24: #{tpu_custom_call.1} parent=15 // pred_fallthru
          _
      $region16: #{tpu_custom_call.1} parent=5 // pred_fallthru
        _
      %p182 = scmp.le.s32.totalorder 1, %s17
      %p183 = scmp.lt.s32.totalorder %s17, 3
      %p184 = pnand %p182, %p183
      %p185 = pneg %p184
      // Predicated region
      $region25: #{tpu_custom_call.1} parent=5 // pred_check
        _
      $region26: #{tpu_custom_call.1} parent=5 // pred_check_branch
        %187 = sbr.rel (%p184) target = $region28
      $region27: #{tpu_custom_call.1} parent=5 // pred_region
        %s188 = ssub.s32 %s17, 1
        %s189 = sand.u32 %s44, 1
        %s190 = scalar_lea.sflag [#allocation3], %s189
        %s191 = sand.u32 %s44, 1
        %s192 = smul.addr %s191, 256
        %s193 = scalar_lea.vmem [#allocation2], %s192
        // Predicated region
        $region29: #{tpu_custom_call.1} parent=27 // pred_check
          %p194 = pneg %p57
        $region30: #{tpu_custom_call.1} parent=27 // pred_check_branch
          %196 = sbr.rel (%p194) target = $region32
        $region31: #{tpu_custom_call.1} parent=27 // pred_region
          %198 = dma.done %s190, 4096
        $region32: #{tpu_custom_call.1} parent=27 // pred_fallthru
          _
        %s199 = sand.u32 %s72, 1
        %s200 = scalar_lea.sflag [#allocation6], %s199
        %s201 = sand.u32 %s72, 1
        %s202 = smul.addr %s201, 256
        %s203 = scalar_lea.vmem [#allocation5], %s202
        // Predicated region
        $region33: #{tpu_custom_call.1} parent=27 // pred_check
          %p204 = pneg %p85
        $region34: #{tpu_custom_call.1} parent=27 // pred_check_branch
          %206 = sbr.rel (%p204) target = $region36
        $region35: #{tpu_custom_call.1} parent=27 // pred_region
          %208 = dma.done %s200, 4096
        $region36: #{tpu_custom_call.1} parent=27 // pred_fallthru
          _
        %s209 = sand.u32 %s44, 1
        %s210 = scalar_lea.sflag [#allocation3], %s209
        %s211 = sand.u32 %s44, 1
        %s212 = smul.addr %s211, 256
        %s213 = scalar_lea.vmem [#allocation2], %s212
        %p214 = pneg %p57
        %p215 = pneg %p54
        %s216 = sand.u32 %s72, 1
        %s217 = scalar_lea.sflag [#allocation6], %s216
        %s218 = sand.u32 %s72, 1
        %s219 = smul.addr %s218, 256
        %s220 = scalar_lea.vmem [#allocation5], %s219
        %p221 = pneg %p85
        %p222 = pneg %p82
        %p223 = pneg %p113
        %p224 = pneg %p110
        %s225 = sand.u32 %s100, 1
        %s226 = scalar_lea.sflag [#allocation4], %s225
        %s227 = sand.u32 %s100, 1
        %s228 = smul.addr %s227, 8
        %s229 = scalar_lea.vmem [#allocation7], %s228
        %s230 = smul.u32 2, %s26
        %s231 = smul.u32 16, %s27
        %s232 = smul.u32 2, %s26
        %s233 = smul.u32 16, %s27
        %v234 = vld [vmem:[%s193] sm:$0xff]
        %v235 = vld [vmem:[%s193 + $0x8] sm:$0xff]
        %v236 = vld [vmem:[%s193 + $0x10] sm:$0xff]
        %v237 = vld [vmem:[%s193 + $0x18] sm:$0xff]
        %v238 = vld [vmem:[%s193 + $0x20] sm:$0xff]
        %v239 = vld [vmem:[%s193 + $0x28] sm:$0xff]
        %v240 = vld [vmem:[%s193 + $0x30] sm:$0xff]
        %v241 = vld [vmem:[%s193 + $0x38] sm:$0xff]
        %v242 = vld [vmem:[%s193 + $0x40] sm:$0xff]
        %v243 = vld [vmem:[%s193 + $0x48] sm:$0xff]
        %v244 = vld [vmem:[%s193 + $0x50] sm:$0xff]
        %v245 = vld [vmem:[%s193 + $0x58] sm:$0xff]
        %v246 = vld [vmem:[%s193 + $0x60] sm:$0xff]
        %v247 = vld [vmem:[%s193 + $0x68] sm:$0xff]
        %v248 = vld [vmem:[%s193 + $0x70] sm:$0xff]
        %v249 = vld [vmem:[%s193 + $0x78] sm:$0xff]
        %v250 = vld [vmem:[%s203] sm:$0xff]
        %v251 = vld [vmem:[%s203 + $0x8] sm:$0xff]
        %v252 = vld [vmem:[%s203 + $0x10] sm:$0xff]
        %v253 = vld [vmem:[%s203 + $0x18] sm:$0xff]
        %v254 = vld [vmem:[%s203 + $0x20] sm:$0xff]
        %v255 = vld [vmem:[%s203 + $0x28] sm:$0xff]
        %v256 = vld [vmem:[%s203 + $0x30] sm:$0xff]
        %v257 = vld [vmem:[%s203 + $0x38] sm:$0xff]
        %v258 = vld [vmem:[%s203 + $0x40] sm:$0xff]
        %v259 = vld [vmem:[%s203 + $0x48] sm:$0xff]
        %v260 = vld [vmem:[%s203 + $0x50] sm:$0xff]
        %v261 = vld [vmem:[%s203 + $0x58] sm:$0xff]
        %v262 = vld [vmem:[%s203 + $0x60] sm:$0xff]
        %v263 = vld [vmem:[%s203 + $0x68] sm:$0xff]
        %v264 = vld [vmem:[%s203 + $0x70] sm:$0xff]
        %v265 = vld [vmem:[%s203 + $0x78] sm:$0xff]
        %v266 = vsub.f32 %v234, %v250
        %v267 = vsub.f32 %v235, %v251
        %v268 = vsub.f32 %v236, %v252
        %v269 = vsub.f32 %v237, %v253
        %v270 = vsub.f32 %v238, %v254
        %v271 = vsub.f32 %v239, %v255
        %v272 = vsub.f32 %v240, %v256
        %v273 = vsub.f32 %v241, %v257
        %v274 = vsub.f32 %v242, %v258
        %v275 = vsub.f32 %v243, %v259
        %v276 = vsub.f32 %v244, %v260
        %v277 = vsub.f32 %v245, %v261
        %v278 = vsub.f32 %v246, %v262
        %v279 = vsub.f32 %v247, %v263
        %v280 = vsub.f32 %v248, %v264
        %v281 = vsub.f32 %v249, %v265
        %v282 = vmul.f32 %v266, %v266
        %v283 = vmul.f32 %v267, %v267
        %v284 = vmul.f32 %v268, %v268
        %v285 = vmul.f32 %v269, %v269
        %v286 = vmul.f32 %v270, %v270
        %v287 = vmul.f32 %v271, %v271
        %v288 = vmul.f32 %v272, %v272
        %v289 = vmul.f32 %v273, %v273
        %v290 = vmul.f32 %v274, %v274
        %v291 = vmul.f32 %v275, %v275
        %v292 = vmul.f32 %v276, %v276
        %v293 = vmul.f32 %v277, %v277
        %v294 = vmul.f32 %v278, %v278
        %v295 = vmul.f32 %v279, %v279
        %v296 = vmul.f32 %v280, %v280
        %v297 = vmul.f32 %v281, %v281
        %v298 = vadd.f32 %v282, 0.0
        %v299 = vadd.f32 %v283, 0.0
        %v300 = vadd.f32 %v284, 0.0
        %v301 = vadd.f32 %v285, 0.0
        %v302 = vadd.f32 %v286, 0.0
        %v303 = vadd.f32 %v287, 0.0
        %v304 = vadd.f32 %v288, 0.0
        %v305 = vadd.f32 %v289, 0.0
        %v306 = vadd.f32 %v290, 0.0
        %v307 = vadd.f32 %v291, 0.0
        %v308 = vadd.f32 %v292, 0.0
        %v309 = vadd.f32 %v293, 0.0
        %v310 = vadd.f32 %v294, 0.0
        %v311 = vadd.f32 %v295, 0.0
        %v312 = vadd.f32 %v296, 0.0
        %v313 = vadd.f32 %v297, 0.0
        %v314 = vld [vmem:[%s193 + $0x80] sm:$0xff]
        %v315 = vld [vmem:[%s193 + $0x88] sm:$0xff]
        %v316 = vld [vmem:[%s193 + $0x90] sm:$0xff]
        %v317 = vld [vmem:[%s193 + $0x98] sm:$0xff]
        %v318 = vld [vmem:[%s193 + $0xa0] sm:$0xff]
        %v319 = vld [vmem:[%s193 + $0xa8] sm:$0xff]
        %v320 = vld [vmem:[%s193 + $0xb0] sm:$0xff]
        %v321 = vld [vmem:[%s193 + $0xb8] sm:$0xff]
        %v322 = vld [vmem:[%s193 + $0xc0] sm:$0xff]
        %v323 = vld [vmem:[%s193 + $0xc8] sm:$0xff]
        %v324 = vld [vmem:[%s193 + $0xd0] sm:$0xff]
        %v325 = vld [vmem:[%s193 + $0xd8] sm:$0xff]
        %v326 = vld [vmem:[%s193 + $0xe0] sm:$0xff]
        %v327 = vld [vmem:[%s193 + $0xe8] sm:$0xff]
        %v328 = vld [vmem:[%s193 + $0xf0] sm:$0xff]
        %v329 = vld [vmem:[%s193 + $0xf8] sm:$0xff]
        %v330 = vld [vmem:[%s203 + $0x80] sm:$0xff]
        %v331 = vld [vmem:[%s203 + $0x88] sm:$0xff]
        %v332 = vld [vmem:[%s203 + $0x90] sm:$0xff]
        %v333 = vld [vmem:[%s203 + $0x98] sm:$0xff]
        %v334 = vld [vmem:[%s203 + $0xa0] sm:$0xff]
        %v335 = vld [vmem:[%s203 + $0xa8] sm:$0xff]
        %v336 = vld [vmem:[%s203 + $0xb0] sm:$0xff]
        %v337 = vld [vmem:[%s203 + $0xb8] sm:$0xff]
        %v338 = vld [vmem:[%s203 + $0xc0] sm:$0xff]
        %v339 = vld [vmem:[%s203 + $0xc8] sm:$0xff]
        %v340 = vld [vmem:[%s203 + $0xd0] sm:$0xff]
        %v341 = vld [vmem:[%s203 + $0xd8] sm:$0xff]
        %v342 = vld [vmem:[%s203 + $0xe0] sm:$0xff]
        %v343 = vld [vmem:[%s203 + $0xe8] sm:$0xff]
        %v344 = vld [vmem:[%s203 + $0xf0] sm:$0xff]
        %v345 = vld [vmem:[%s203 + $0xf8] sm:$0xff]
        %v346 = vsub.f32 %v314, %v330
        %v347 = vsub.f32 %v315, %v331
        %v348 = vsub.f32 %v316, %v332
        %v349 = vsub.f32 %v317, %v333
        %v350 = vsub.f32 %v318, %v334
        %v351 = vsub.f32 %v319, %v335
        %v352 = vsub.f32 %v320, %v336
        %v353 = vsub.f32 %v321, %v337
        %v354 = vsub.f32 %v322, %v338
        %v355 = vsub.f32 %v323, %v339
        %v356 = vsub.f32 %v324, %v340
        %v357 = vsub.f32 %v325, %v341
        %v358 = vsub.f32 %v326, %v342
        %v359 = vsub.f32 %v327, %v343
        %v360 = vsub.f32 %v328, %v344
        %v361 = vsub.f32 %v329, %v345
        %v362 = vmul.f32 %v346, %v346
        %v363 = vmul.f32 %v347, %v347
        %v364 = vmul.f32 %v348, %v348
        %v365 = vmul.f32 %v349, %v349
        %v366 = vmul.f32 %v350, %v350
        %v367 = vmul.f32 %v351, %v351
        %v368 = vmul.f32 %v352, %v352
        %v369 = vmul.f32 %v353, %v353
        %v370 = vmul.f32 %v354, %v354
        %v371 = vmul.f32 %v355, %v355
        %v372 = vmul.f32 %v356, %v356
        %v373 = vmul.f32 %v357, %v357
        %v374 = vmul.f32 %v358, %v358
        %v375 = vmul.f32 %v359, %v359
        %v376 = vmul.f32 %v360, %v360
        %v377 = vmul.f32 %v361, %v361
        %v378 = vadd.f32 %v298, %v362
        %v379 = vadd.f32 %v299, %v363
        %v380 = vadd.f32 %v300, %v364
        %v381 = vadd.f32 %v301, %v365
        %v382 = vadd.f32 %v302, %v366
        %v383 = vadd.f32 %v303, %v367
        %v384 = vadd.f32 %v304, %v368
        %v385 = vadd.f32 %v305, %v369
        %v386 = vadd.f32 %v306, %v370
        %v387 = vadd.f32 %v307, %v371
        %v388 = vadd.f32 %v308, %v372
        %v389 = vadd.f32 %v309, %v373
        %v390 = vadd.f32 %v310, %v374
        %v391 = vadd.f32 %v311, %v375
        %v392 = vadd.f32 %v312, %v376
        %v393 = vadd.f32 %v313, %v377
        %v394 = vadd.f32 %v378, %v379
        %v395 = vadd.f32 %v394, %v380
        %v396 = vadd.f32 %v395, %v381
        %v397 = vadd.f32 %v396, %v382
        %v398 = vadd.f32 %v397, %v383
        %v399 = vadd.f32 %v398, %v384
        %v400 = vadd.f32 %v399, %v385
        %v401 = vadd.f32 %v400, %v386
        %v402 = vadd.f32 %v401, %v387
        %v403 = vadd.f32 %v402, %v388
        %v404 = vadd.f32 %v403, %v389
        %v405 = vadd.f32 %v404, %v390
        %v406 = vadd.f32 %v405, %v391
        %v407 = vadd.f32 %v406, %v392
        %v408 = vadd.f32 %v407, %v393
        %409 = vst [vmem:[%s229] sm:$0xff] %v408
        %s410 = sand.u32 %s100, 1
        %s411 = scalar_lea.sflag [#allocation4], %s410
        %s412 = sand.u32 %s100, 1
        %s413 = smul.addr %s412, 8
        %s414 = scalar_lea.vmem [#allocation7], %s413
        // Predicated region
        $region37: #{tpu_custom_call.1} parent=27 // pred_check
          %p415 = pneg %p110
        $region38: #{tpu_custom_call.1} parent=27 // pred_check_branch
          %417 = sbr.rel (%p415) target = $region40
        $region39: #{tpu_custom_call.1} parent=27 // pred_region
          %419 = vsyncadd %s411, 0
          %s420 = sadd.s32 %s27, %s26
          %s421 = smul.addr %s420, 8
          %s422 = scalar_lea.hbm %s2, %s421
          %s424 = sshll.u32 %s414, 4
          %s425 = int_to_ptr.vmem [resolvable:$true] %s424
          %s426 = sshll.u32 %s422, 4
          %s427 = int_to_ptr.hbm [resolvable:$true] %s426
          %429 = dma.vmem_to_hbm [thread:$0]  %s425, 128, %s427, %s411
        $region40: #{tpu_custom_call.1} parent=27 // pred_fallthru
          _
      $region28: #{tpu_custom_call.1} parent=5 // pred_fallthru
        _
      %p430 = scmp.le.s32.totalorder 2, %s17
      // Predicated region
      $region41: #{tpu_custom_call.1} parent=5 // pred_check
        %p431 = pneg %p430
      $region42: #{tpu_custom_call.1} parent=5 // pred_check_branch
        %433 = sbr.rel (%p431) target = $region44
      $region43: #{tpu_custom_call.1} parent=5 // pred_region
        %s434 = ssub.s32 %s17, 2
        // Predicated region
        $region45: #{tpu_custom_call.1} parent=43 // pred_check
          %p435 = pneg %p116
        $region46: #{tpu_custom_call.1} parent=43 // pred_check_branch
          %437 = sbr.rel (%p435) target = $region48
        $region47: #{tpu_custom_call.1} parent=43 // pred_region
          %s438 = sand.u32 %s101, 1
          %s439 = scalar_lea.sflag [#allocation4], %s438
          %s440 = sand.u32 %s101, 1
          %s441 = smul.addr %s440, 8
          %s442 = scalar_lea.vmem [#allocation7], %s441
          %444 = dma.done %s439, 128
        $region48: #{tpu_custom_call.1} parent=43 // pred_fallthru
          _
      $region44: #{tpu_custom_call.1} parent=5 // pred_fallthru
        _
    $region6: #{tpu_custom_call.1} parent=1 // loop_footer
      %s21 = sadd.s32 1, %s17
    $region7: #{tpu_custom_call.1} parent=1 // loop_footer_branch
      %16 = sbr.rel target = $region3
    $region8: #{tpu_custom_call.1} parent=1 // loop_exit
      _
    %445 = vsyncpa [#allocation3], 1
    %s446 = scalar_lea.sflag [#allocation3], 1
    %447 = vsyncpa %s446, 1
    %448 = vsyncpa [#allocation6], 1
    %s449 = scalar_lea.sflag [#allocation6], 1
    %450 = vsyncpa %s449, 1
    %451 = vsyncpa [#allocation4], 1
    %s452 = scalar_lea.sflag [#allocation4], 1
    %453 = vsyncpa %s452, 1

</llo_original>
